<compile_context>
chip_gen: v6e
topology: v6e:2x2x1
jax: 0.10.0
libtpu: 0.0.40
codegen_flags: <defaults>
</compile_context>

<pallas_src>
import jax
import jax.numpy as jnp
from jax import lax
from jax.experimental import pallas as pl
from jax.experimental.pallas import tpu as pltpu


# -------------------------- Pallas kernel (hot path) -------------------------
def _make_fused_season_kernel(num_steps, use_bf16=False):
    """Fused chain: for each scale i, out_{i+1} = GELU(W1_i@cur + b1_i)@W2_i... + skip.

    Ref ordering (all transposed, lanes = M):
      refs[0]                       : x0^T block            (L0, tn)
      refs[1 : 1+num_steps]         : skip_i^T blocks       (L_{i+1}, tn)
      refs[1+ns : 1+5*ns]           : (w1, b1, w2, b2) * ns  torch-layout weights
      refs[1+5*ns : ]               : out_i^T blocks        (L_{i+1}, tn)
    """
    dot_dtype = jnp.bfloat16 if use_bf16 else jnp.float32
    inv_sqrt2 = 0.7071067811865476  # 1/sqrt(2), exact erf-GELU (torch default)

    def kernel(*refs):
        x_ref = refs[0]
        skip_refs = refs[1:1 + num_steps]
        w_refs = refs[1 + num_steps:1 + 5 * num_steps]
        out_refs = refs[1 + 5 * num_steps:]

        cur = x_ref[...].astype(jnp.float32)          # (L_i, tn), starts at L_0
        for i in range(num_steps):                    # statically unrolled
            w1, b1, w2, b2 = w_refs[4 * i:4 * i + 4]
            # h^T = W1 @ cur^T + b1   (W1 is torch-layout (out, in))
            h = jnp.dot(w1[...].astype(dot_dtype), cur.astype(dot_dtype),
                        preferred_element_type=jnp.float32)
            h = h + b1[...]                           # (L_out, 1) lane-broadcast
            # exact erf-GELU (matches nn.GELU default)
            h = 0.5 * h * (1.0 + lax.erf(h * inv_sqrt2))
            # y^T = W2 @ h^T + b2 + skip^T
            y = jnp.dot(w2[...].astype(dot_dtype), h.astype(dot_dtype),
                        preferred_element_type=jnp.float32)
            y = y + b2[...] + skip_refs[i][...].astype(jnp.float32)
            out_refs[i][...] = y.astype(out_refs[i].dtype)
            cur = y                                   # feeds next (lower) scale

    return kernel


# ----------------------------- module equivalent -----------------------------
class MultiScaleSeasonMixingPallas:
    """JAX/Pallas port of MultiScaleSeasonMixing.

    down_sampling_layers[i]: Linear(L_i -> L_{i+1}) -> GELU -> Linear(L_{i+1} -> L_{i+1})
    with L_i = seq_len // down_sampling_window ** i.
    Weights are stored in torch layout (out_features, in_features); biases as
    (out_features, 1) column vectors so they broadcast along the lane (M) axis.
    """

    def __init__(self, seq_len, down_sampling_window, num_scales, key,
                 lane_tile=128, use_bf16=False):
        self.lengths = [seq_len // down_sampling_window ** i for i in range(num_scales)]
        self.lane_tile = lane_tile
        self.use_bf16 = use_bf16
        self.params = []
        for i in range(num_scales - 1):
            l_in, l_out = self.lengths[i], self.lengths[i + 1]
            key, k1, k2, k3, k4 = jax.random.split(key, 5)
            # torch.nn.Linear default init: U(-1/sqrt(fan_in), 1/sqrt(fan_in))
            bnd1 = 1.0 / jnp.sqrt(jnp.float32(l_in))
            bnd2 = 1.0 / jnp.sqrt(jnp.float32(l_out))
            w1 = jax.random.uniform(k1, (l_out, l_in), jnp.float32, -bnd1, bnd1)
            b1 = jax.random.uniform(k2, (l_out, 1), jnp.float32, -bnd1, bnd1)
            w2 = jax.random.uniform(k3, (l_out, l_out), jnp.float32, -bnd2, bnd2)
            b2 = jax.random.uniform(k4, (l_out, 1), jnp.float32, -bnd2, bnd2)
            self.params.append((w1, b1, w2, b2))

    def __call__(self, season_list):
        B, F, _ = season_list[0].shape
        M = B * F
        num_steps = len(season_list) - 1
        if num_steps == 0:
            return list(season_list)

        tn = self.lane_tile
        m_pad = pl.cdiv(M, tn) * tn          # pad lanes up to a full tile
        grid = (m_pad // tn,)

        # Flatten to (M, L) then transpose to (L, M) so B*F sits on lanes.
        flat_t = []
        for s in season_list:
            f = s.reshape(M, -1).T           # (L, M)
            if m_pad != M:
                f = jnp.pad(f, ((0, 0), (0, m_pad - M)))
            flat_t.append(f)

        # --- build inputs / specs for the single fused pallas_call ----------
        inputs = [flat_t[0]]
        in_specs = [pl.BlockSpec((self.lengths[0], tn), lambda j: (0, j))]
        for i in range(num_steps):
            inputs.append(flat_t[i + 1])
            in_specs.append(pl.BlockSpec((self.lengths[i + 1], tn), lambda j: (0, j)))
        for i in range(num_steps):
            w1, b1, w2, b2 = self.params[i]
            l_in, l_out = self.lengths[i], self.lengths[i + 1]
            inputs += [w1, b1, w2, b2]
            in_specs += [
                pl.BlockSpec((l_out, l_in), lambda j: (0, 0)),   # W1 (broadcast)
                pl.BlockSpec((l_out, 1), lambda j: (0, 0)),      # b1
                pl.BlockSpec((l_out, l_out), lambda j: (0, 0)),  # W2
                pl.BlockSpec((l_out, 1), lambda j: (0, 0)),      # b2
            ]

        out_shapes = tuple(
            jax.ShapeDtypeStruct((self.lengths[i + 1], m_pad), jnp.float32)
            for i in range(num_steps)
        )
        out_specs = tuple(
            pl.BlockSpec((self.lengths[i + 1], tn), lambda j: (0, j))
            for i in range(num_steps)
        )

        kernel = _make_fused_season_kernel(num_steps, use_bf16=self.use_bf16)
        outs = pl.pallas_call(
            kernel,
            out_shape=out_shapes,
            grid_spec=pltpu.PrefetchScalarGridSpec(
                num_scalar_prefetch=0,
                grid=grid,
                in_specs=in_specs,
                out_specs=out_specs,
            ),
            compiler_params=pltpu.CompilerParams(
                dimension_semantics=("parallel",),
            ),
        )(*inputs)

        # Un-pad, transpose back and reshape to (B, F, L_i).
        result = [season_list[0]]
        for i in range(num_steps):
            o = outs[i][:, :M].T.reshape(B, F, self.lengths[i + 1])
            result.append(o)
        return result

    # pure-JAX reference for correctness checking
    def reference(self, season_list):
        B, F, _ = season_list[0].shape
        M = B * F
        flat = [s.reshape(M, -1) for s in season_list]
        out_high = flat[0]
        outs = [out_high]
        for i in range(len(flat) - 1):
            w1, b1, w2, b2 = self.params[i]
            h = jax.nn.gelu(out_high @ w1.T + b1[:, 0], approximate=False)
            out_high = h @ w2.T + b2[:, 0] + flat[i + 1]
            outs.append(out_high)
        return [s.reshape(B, F, -1) for s in outs]


# ------------------------------------ main ------------------------------------
if __name__ == "__main__":
    # Small config: seq_len=16, down_sampling_window=2, num_scales=3
    #   -> season scales of length 16, 8, 4; B*F = 8 rows (padded to one 128-lane tile).
    B, F = 2, 4
    seq_len, window, num_scales = 16, 2, 3

    key = jax.random.PRNGKey(0)
    key, kp = jax.random.split(key)
    module = MultiScaleSeasonMixingPallas(seq_len, window, num_scales, kp)

    season_list = []
    for L in module.lengths:
        key, kx = jax.random.split(key)
        season_list.append(jax.random.normal(kx, (B, F, L), jnp.float32))

    out = module(season_list)
    out = [jax.block_until_ready(o) for o in out]

    ref = module.reference(season_list)
    for o, r in zip(out, ref):
        assert o.shape == r.shape, f"shape mismatch: {o.shape} vs {r.shape}"
        err = jnp.max(jnp.abs(o - r))
        assert jnp.allclose(o, r, atol=1e-5, rtol=1e-5), f"mismatch: max abs err {err}"

    print("KERNEL_OK")
</pallas_src>

<mosaic_0001>
module attributes {stable_mosaic.version = 11 : i64} {
  func.func @kernel(%arg0: i32, %arg1: memref<16x128xf32, #tpu.memory_space<vmem>>, %arg2: memref<8x128xf32, #tpu.memory_space<vmem>>, %arg3: memref<4x128xf32, #tpu.memory_space<vmem>>, %arg4: memref<8x16xf32, #tpu.memory_space<vmem>>, %arg5: memref<8x1xf32, #tpu.memory_space<vmem>>, %arg6: memref<8x8xf32, #tpu.memory_space<vmem>>, %arg7: memref<8x1xf32, #tpu.memory_space<vmem>>, %arg8: memref<4x8xf32, #tpu.memory_space<vmem>>, %arg9: memref<4x1xf32, #tpu.memory_space<vmem>>, %arg10: memref<4x4xf32, #tpu.memory_space<vmem>>, %arg11: memref<4x1xf32, #tpu.memory_space<vmem>>, %arg12: memref<8x128xf32, #tpu.memory_space<vmem>>, %arg13: memref<4x128xf32, #tpu.memory_space<vmem>>) attributes {dimension_semantics = [#tpu.dimension_semantics<parallel>], iteration_bounds = array<i64: 1>, scalar_prefetch = 0 : i64, scratch_operands = 0 : i64, tpu.core_type = #tpu.core_type<tc>, window_params = [{transform_indices = @transform_0, window_bounds = array<i64: 16, 128>}, {transform_indices = @transform_1, window_bounds = array<i64: 8, 128>}, {transform_indices = @transform_2, window_bounds = array<i64: 4, 128>}, {pipeline_mode = #tpu.pipeline_mode<synchronous>, transform_indices = @transform_3, window_bounds = array<i64: 8, 16>}, {pipeline_mode = #tpu.pipeline_mode<synchronous>, transform_indices = @transform_4, window_bounds = array<i64: 8, 1>}, {pipeline_mode = #tpu.pipeline_mode<synchronous>, transform_indices = @transform_5, window_bounds = array<i64: 8, 8>}, {pipeline_mode = #tpu.pipeline_mode<synchronous>, transform_indices = @transform_6, window_bounds = array<i64: 8, 1>}, {pipeline_mode = #tpu.pipeline_mode<synchronous>, transform_indices = @transform_7, window_bounds = array<i64: 4, 8>}, {pipeline_mode = #tpu.pipeline_mode<synchronous>, transform_indices = @transform_8, window_bounds = array<i64: 4, 1>}, {pipeline_mode = #tpu.pipeline_mode<synchronous>, transform_indices = @transform_9, window_bounds = array<i64: 4, 4>}, {pipeline_mode = #tpu.pipeline_mode<synchronous>, transform_indices = @transform_10, window_bounds = array<i64: 4, 1>}, {transform_indices = @transform_11, window_bounds = array<i64: 8, 128>}, {transform_indices = @transform_12, window_bounds = array<i64: 4, 128>}]} {
    %c0 = arith.constant 0 : index
    %c0_0 = arith.constant 0 : index
    %0 = vector.load %arg1[%c0, %c0_0] : memref<16x128xf32, #tpu.memory_space<vmem>>, vector<16x128xf32>
    %c0_1 = arith.constant 0 : index
    %c0_2 = arith.constant 0 : index
    %1 = vector.load %arg4[%c0_1, %c0_2] : memref<8x16xf32, #tpu.memory_space<vmem>>, vector<8x16xf32>
    %cst = arith.constant dense<0.000000e+00> : vector<8x128xf32>
    %2 = tpu.matmul %1, %0, %cst {dimension_numbers = #tpu.dot_dimension_numbers<[1], [0], [0], [1], [0, 0, 1, 1], [], []>} : vector<8x16xf32>, vector<16x128xf32>, vector<8x128xf32> -> vector<8x128xf32>
    %c0_3 = arith.constant 0 : index
    %c0_4 = arith.constant 0 : index
    %3 = vector.load %arg5[%c0_3, %c0_4] : memref<8x1xf32, #tpu.memory_space<vmem>>, vector<8x1xf32>
    %4 = vector.broadcast %3 : vector<8x1xf32> to vector<8x128xf32>
    %5 = arith.addf %2, %4 : vector<8x128xf32>
    %cst_5 = arith.constant 5.000000e-01 : f32
    %6 = vector.broadcast %cst_5 : f32 to vector<8x128xf32>
    %7 = arith.mulf %6, %5 : vector<8x128xf32>
    %cst_6 = arith.constant 0.707106769 : f32
    %8 = vector.broadcast %cst_6 : f32 to vector<8x128xf32>
    %9 = arith.mulf %5, %8 : vector<8x128xf32>
    %10 = math.erf %9 : vector<8x128xf32>
    %cst_7 = arith.constant 1.000000e+00 : f32
    %11 = vector.broadcast %cst_7 : f32 to vector<8x128xf32>
    %12 = arith.addf %11, %10 : vector<8x128xf32>
    %13 = arith.mulf %7, %12 : vector<8x128xf32>
    %c0_8 = arith.constant 0 : index
    %c0_9 = arith.constant 0 : index
    %14 = vector.load %arg6[%c0_8, %c0_9] : memref<8x8xf32, #tpu.memory_space<vmem>>, vector<8x8xf32>
    %cst_10 = arith.constant dense<0.000000e+00> : vector<8x128xf32>
    %15 = tpu.matmul %14, %13, %cst_10 {dimension_numbers = #tpu.dot_dimension_numbers<[1], [0], [0], [1], [0, 0, 1, 1], [], []>} : vector<8x8xf32>, vector<8x128xf32>, vector<8x128xf32> -> vector<8x128xf32>
    %c0_11 = arith.constant 0 : index
    %c0_12 = arith.constant 0 : index
    %16 = vector.load %arg7[%c0_11, %c0_12] : memref<8x1xf32, #tpu.memory_space<vmem>>, vector<8x1xf32>
    %17 = vector.broadcast %16 : vector<8x1xf32> to vector<8x128xf32>
    %18 = arith.addf %15, %17 : vector<8x128xf32>
    %c0_13 = arith.constant 0 : index
    %c0_14 = arith.constant 0 : index
    %19 = vector.load %arg2[%c0_13, %c0_14] : memref<8x128xf32, #tpu.memory_space<vmem>>, vector<8x128xf32>
    %20 = arith.addf %18, %19 : vector<8x128xf32>
    %c0_15 = arith.constant 0 : index
    %c0_16 = arith.constant 0 : index
    %21 = vector.load %arg12[%c0_15, %c0_16] : memref<8x128xf32, #tpu.memory_space<vmem>>, vector<8x128xf32>
    tpu.vector_store %arg12[%c0_15, %c0_16], %20 {strides = array<i32>} : memref<8x128xf32, #tpu.memory_space<vmem>>, vector<8x128xf32>,
    %c0_17 = arith.constant 0 : index
    %c0_18 = arith.constant 0 : index
    %22 = vector.load %arg8[%c0_17, %c0_18] : memref<4x8xf32, #tpu.memory_space<vmem>>, vector<4x8xf32>
    %cst_19 = arith.constant dense<0.000000e+00> : vector<4x128xf32>
    %23 = tpu.matmul %22, %20, %cst_19 {dimension_numbers = #tpu.dot_dimension_numbers<[1], [0], [0], [1], [0, 0, 1, 1], [], []>} : vector<4x8xf32>, vector<8x128xf32>, vector<4x128xf32> -> vector<4x128xf32>
    %c0_20 = arith.constant 0 : index
    %c0_21 = arith.constant 0 : index
    %24 = vector.load %arg9[%c0_20, %c0_21] : memref<4x1xf32, #tpu.memory_space<vmem>>, vector<4x1xf32>
    %25 = vector.broadcast %24 : vector<4x1xf32> to vector<4x128xf32>
    %26 = arith.addf %23, %25 : vector<4x128xf32>
    %cst_22 = arith.constant 5.000000e-01 : f32
    %27 = vector.broadcast %cst_22 : f32 to vector<4x128xf32>
    %28 = arith.mulf %27, %26 : vector<4x128xf32>
    %cst_23 = arith.constant 0.707106769 : f32
    %29 = vector.broadcast %cst_23 : f32 to vector<4x128xf32>
    %30 = arith.mulf %26, %29 : vector<4x128xf32>
    %31 = math.erf %30 : vector<4x128xf32>
    %cst_24 = arith.constant 1.000000e+00 : f32
    %32 = vector.broadcast %cst_24 : f32 to vector<4x128xf32>
    %33 = arith.addf %32, %31 : vector<4x128xf32>
    %34 = arith.mulf %28, %33 : vector<4x128xf32>
    %c0_25 = arith.constant 0 : index
    %c0_26 = arith.constant 0 : index
    %35 = vector.load %arg10[%c0_25, %c0_26] : memref<4x4xf32, #tpu.memory_space<vmem>>, vector<4x4xf32>
    %cst_27 = arith.constant dense<0.000000e+00> : vector<4x128xf32>
    %36 = tpu.matmul %35, %34, %cst_27 {dimension_numbers = #tpu.dot_dimension_numbers<[1], [0], [0], [1], [0, 0, 1, 1], [], []>} : vector<4x4xf32>, vector<4x128xf32>, vector<4x128xf32> -> vector<4x128xf32>
    %c0_28 = arith.constant 0 : index
    %c0_29 = arith.constant 0 : index
    %37 = vector.load %arg11[%c0_28, %c0_29] : memref<4x1xf32, #tpu.memory_space<vmem>>, vector<4x1xf32>
    %38 = vector.broadcast %37 : vector<4x1xf32> to vector<4x128xf32>
    %39 = arith.addf %36, %38 : vector<4x128xf32>
    %c0_30 = arith.constant 0 : index
    %c0_31 = arith.constant 0 : index
    %40 = vector.load %arg3[%c0_30, %c0_31] : memref<4x128xf32, #tpu.memory_space<vmem>>, vector<4x128xf32>
    %41 = arith.addf %39, %40 : vector<4x128xf32>
    %c0_32 = arith.constant 0 : index
    %c0_33 = arith.constant 0 : index
    %42 = vector.load %arg13[%c0_32, %c0_33] : memref<4x128xf32, #tpu.memory_space<vmem>>, vector<4x128xf32>
    tpu.vector_store %arg13[%c0_32, %c0_33], %41 {strides = array<i32>} : memref<4x128xf32, #tpu.memory_space<vmem>>, vector<4x128xf32>,
    return
  }
  func.func @transform_0(%arg0: i32) -> (i32, i32) {
    %c0_i32 = arith.constant 0 : i32
    %c0_i32_0 = arith.constant 0 : i32
    return %c0_i32, %arg0 : i32, i32
  }
  func.func @transform_1(%arg0: i32) -> (i32, i32) {
    %c0_i32 = arith.constant 0 : i32
    %c0_i32_0 = arith.constant 0 : i32
    return %c0_i32, %arg0 : i32, i32
  }
  func.func @transform_2(%arg0: i32) -> (i32, i32) {
    %c0_i32 = arith.constant 0 : i32
    %c0_i32_0 = arith.constant 0 : i32
    return %c0_i32, %arg0 : i32, i32
  }
  func.func @transform_3(%arg0: i32) -> (i32, i32) {
    %c0_i32 = arith.constant 0 : i32
    %c0_i32_0 = arith.constant 0 : i32
    %c0_i32_1 = arith.constant 0 : i32
    return %c0_i32, %c0_i32_0 : i32, i32
  }
  func.func @transform_4(%arg0: i32) -> (i32, i32) {
    %c0_i32 = arith.constant 0 : i32
    %c0_i32_0 = arith.constant 0 : i32
    %c0_i32_1 = arith.constant 0 : i32
    return %c0_i32, %c0_i32_0 : i32, i32
  }
  func.func @transform_5(%arg0: i32) -> (i32, i32) {
    %c0_i32 = arith.constant 0 : i32
    %c0_i32_0 = arith.constant 0 : i32
    %c0_i32_1 = arith.constant 0 : i32
    return %c0_i32, %c0_i32_0 : i32, i32
  }
  func.func @transform_6(%arg0: i32) -> (i32, i32) {
    %c0_i32 = arith.constant 0 : i32
    %c0_i32_0 = arith.constant 0 : i32
    %c0_i32_1 = arith.constant 0 : i32
    return %c0_i32, %c0_i32_0 : i32, i32
  }
  func.func @transform_7(%arg0: i32) -> (i32, i32) {
    %c0_i32 = arith.constant 0 : i32
    %c0_i32_0 = arith.constant 0 : i32
    %c0_i32_1 = arith.constant 0 : i32
    return %c0_i32, %c0_i32_0 : i32, i32
  }
  func.func @transform_8(%arg0: i32) -> (i32, i32) {
    %c0_i32 = arith.constant 0 : i32
    %c0_i32_0 = arith.constant 0 : i32
    %c0_i32_1 = arith.constant 0 : i32
    return %c0_i32, %c0_i32_0 : i32, i32
  }
  func.func @transform_9(%arg0: i32) -> (i32, i32) {
    %c0_i32 = arith.constant 0 : i32
    %c0_i32_0 = arith.constant 0 : i32
    %c0_i32_1 = arith.constant 0 : i32
    return %c0_i32, %c0_i32_0 : i32, i32
  }
  func.func @transform_10(%arg0: i32) -> (i32, i32) {
    %c0_i32 = arith.constant 0 : i32
    %c0_i32_0 = arith.constant 0 : i32
    %c0_i32_1 = arith.constant 0 : i32
    return %c0_i32, %c0_i32_0 : i32, i32
  }
  func.func @transform_11(%arg0: i32) -> (i32, i32) {
    %c0_i32 = arith.constant 0 : i32
    %c0_i32_0 = arith.constant 0 : i32
    return %c0_i32, %arg0 : i32, i32
  }
  func.func @transform_12(%arg0: i32) -> (i32, i32) {
    %c0_i32 = arith.constant 0 : i32
    %c0_i32_0 = arith.constant 0 : i32
    return %c0_i32, %arg0 : i32, i32
  }
}

</mosaic_0001>

<llo_original>
// kernel: tpu_custom_call.1
$region0: #{tpu_custom_call.1}
  #allocation0 [shape = 'u32[]', space=smem, size = 0x4, offset = 0x4, fixed_abs, tag = 'smem constant byte address 0x4 - core index']
  #allocation1 [shape = 'u32[144,128]{1,0:T(1,128)}', space=vmem, size = 0x12000, scoped, tag = 'internal scratch']
  %s0 = inlined_call_operand.vmem [shape: f32[16,128], index: 0, kind: input, shape index: {}]
  %s1 = inlined_call_operand.vmem [shape: f32[8,128], index: 1, kind: input, shape index: {}]
  %s2 = inlined_call_operand.hbm [shape: f32[4,128], index: 2, kind: input, shape index: {}]
  %s3 = inlined_call_operand.vmem [shape: f32[8,16], index: 3, kind: input, shape index: {}]
  %s4 = inlined_call_operand.vmem [shape: f32[8,1], index: 4, kind: input, shape index: {}]
  %s5 = inlined_call_operand.hbm [shape: f32[8,8], index: 5, kind: input, shape index: {}]
  %s6 = inlined_call_operand.vmem [shape: f32[8,1], index: 6, kind: input, shape index: {}]
  %s7 = inlined_call_operand.vmem [shape: f32[4,8], index: 7, kind: input, shape index: {}]
  %s8 = inlined_call_operand.vmem [shape: f32[4,1], index: 8, kind: input, shape index: {}]
  %s9 = inlined_call_operand.vmem [shape: f32[4,4], index: 9, kind: input, shape index: {}]
  %s10 = inlined_call_operand.vmem [shape: f32[4,1], index: 10, kind: input, shape index: {}]
  %s11 = inlined_call_operand.hbm [shape: f32[8,128], index: 11, kind: output, shape index: {0}]
  %s12 = inlined_call_operand.hbm [shape: f32[4,128], index: 12, kind: output, shape index: {1}]
  %13 = xla_tuple %s11, %s12
  %s14 = sld [smem:[#allocation0]]
  $region70: #{tpu_custom_call.1} parent=0
    _
  %s16 = ssub.s32 1, %s14
  %s17 = scalar_select 0, %s16, %s14
  $region1: #{tpu_custom_call.1} parent=0
    #allocation2 [shape = 'u8[2048]{0}', space=vmem, size = 0x800, scoped, tag = 'input window, operand 2, single buffered']
    #allocation3 [shape = 's32[1]{0}', space=sflag, size = 0x4, scoped, tag = 'scoped memory for tpu_custom_call.1']
    #allocation4 [shape = 's32[1]{0}', space=sflag, size = 0x4, scoped, tag = 'scoped memory for tpu_custom_call.1']
    #allocation5 [shape = 'u8[4096]{0}', space=vmem, size = 0x1000, scoped, tag = 'input window, operand 5, single buffered']
    #allocation6 [shape = 's32[1]{0}', space=sflag, size = 0x4, scoped, tag = 'scoped memory for tpu_custom_call.1']
    #allocation7 [shape = 'u8[4096]{0}', space=vmem, size = 0x1000, scoped, tag = 'output window, operand 0, single buffered']
    #allocation8 [shape = 'u8[2048]{0}', space=vmem, size = 0x800, scoped, tag = 'output window, operand 1, single buffered']
    #allocation9 [shape = 's32[1]{0}', space=sflag, size = 0x4, scoped, tag = 'scoped memory for tpu_custom_call.1']
    %18 = vsyncpa [#allocation3], 0
    %19 = vsyncpa [#allocation6], 0
    %20 = vsyncpa [#allocation4], 0
    %21 = vsyncpa [#allocation9], 0
    // Predicated region
    $region2: #{tpu_custom_call.1} parent=1 // pred_check
      _
    $region3: #{tpu_custom_call.1} parent=1 // pred_check_branch
      %23 = sbr.rel (0) target = $region5
    $region4: #{tpu_custom_call.1} parent=1 // pred_region
      _
    $region5: #{tpu_custom_call.1} parent=1 // pred_fallthru
      _
    // Predicated region
    $region6: #{tpu_custom_call.1} parent=1 // pred_check
      _
    $region7: #{tpu_custom_call.1} parent=1 // pred_check_branch
      %25 = sbr.rel (0) target = $region9
    $region8: #{tpu_custom_call.1} parent=1 // pred_region
      _
    $region9: #{tpu_custom_call.1} parent=1 // pred_fallthru
      _
    // Predicated region
    $region10: #{tpu_custom_call.1} parent=1 // pred_check
      _
    $region11: #{tpu_custom_call.1} parent=1 // pred_check_branch
      %27 = sbr.rel (0) target = $region13
    $region12: #{tpu_custom_call.1} parent=1 // pred_region
      %s29 = ssub.s32 64, 64
      %30 = vsyncadd [#allocation3], %s29
      %s32 = sshll.u32 [#allocation2], 4
      %s33 = int_to_ptr.vmem [resolvable:$true] %s32
      %35 = dma.hbm_to_vmem [thread:$0]  %s2, 64, %s33, [#allocation3]
    $region13: #{tpu_custom_call.1} parent=1 // pred_fallthru
      _
    // Predicated region
    $region14: #{tpu_custom_call.1} parent=1 // pred_check
      _
    $region15: #{tpu_custom_call.1} parent=1 // pred_check_branch
      %37 = sbr.rel (0) target = $region17
    $region16: #{tpu_custom_call.1} parent=1 // pred_region
      _
    $region17: #{tpu_custom_call.1} parent=1 // pred_fallthru
      _
    // Predicated region
    $region18: #{tpu_custom_call.1} parent=1 // pred_check
      _
    $region19: #{tpu_custom_call.1} parent=1 // pred_check_branch
      %39 = sbr.rel (0) target = $region21
    $region20: #{tpu_custom_call.1} parent=1 // pred_region
      _
    $region21: #{tpu_custom_call.1} parent=1 // pred_fallthru
      _
    // Predicated region
    $region22: #{tpu_custom_call.1} parent=1 // pred_check
      _
    $region23: #{tpu_custom_call.1} parent=1 // pred_check_branch
      %41 = sbr.rel (0) target = $region25
    $region24: #{tpu_custom_call.1} parent=1 // pred_region
      %s43 = ssub.s32 128, 128
      %44 = vsyncadd [#allocation6], %s43
      %s46 = sshll.u32 [#allocation5], 4
      %s47 = int_to_ptr.vmem [resolvable:$true] %s46
      %49 = dma.hbm_to_vmem [thread:$0]  %s5, 128, %s47, [#allocation6]
    $region25: #{tpu_custom_call.1} parent=1 // pred_fallthru
      _
    // Predicated region
    $region26: #{tpu_custom_call.1} parent=1 // pred_check
      _
    $region27: #{tpu_custom_call.1} parent=1 // pred_check_branch
      %51 = sbr.rel (0) target = $region29
    $region28: #{tpu_custom_call.1} parent=1 // pred_region
      _
    $region29: #{tpu_custom_call.1} parent=1 // pred_fallthru
      _
    // Predicated region
    $region30: #{tpu_custom_call.1} parent=1 // pred_check
      _
    $region31: #{tpu_custom_call.1} parent=1 // pred_check_branch
      %53 = sbr.rel (0) target = $region33
    $region32: #{tpu_custom_call.1} parent=1 // pred_region
      _
    $region33: #{tpu_custom_call.1} parent=1 // pred_fallthru
      _
    // Predicated region
    $region34: #{tpu_custom_call.1} parent=1 // pred_check
      _
    $region35: #{tpu_custom_call.1} parent=1 // pred_check_branch
      %55 = sbr.rel (0) target = $region37
    $region36: #{tpu_custom_call.1} parent=1 // pred_region
      _
    $region37: #{tpu_custom_call.1} parent=1 // pred_fallthru
      _
    // Predicated region
    $region38: #{tpu_custom_call.1} parent=1 // pred_check
      _
    $region39: #{tpu_custom_call.1} parent=1 // pred_check_branch
      %57 = sbr.rel (0) target = $region41
    $region40: #{tpu_custom_call.1} parent=1 // pred_region
      _
    $region41: #{tpu_custom_call.1} parent=1 // pred_fallthru
      _
    // Predicated region
    $region42: #{tpu_custom_call.1} parent=1 // pred_check
      _
    $region43: #{tpu_custom_call.1} parent=1 // pred_check_branch
      %59 = sbr.rel (0) target = $region45
    $region44: #{tpu_custom_call.1} parent=1 // pred_region
      _
    $region45: #{tpu_custom_call.1} parent=1 // pred_fallthru
      _
    // Predicated region
    $region46: #{tpu_custom_call.1} parent=1 // pred_check
      _
    $region47: #{tpu_custom_call.1} parent=1 // pred_check_branch
      %61 = sbr.rel (0) target = $region49
    $region48: #{tpu_custom_call.1} parent=1 // pred_region
      %62 = dma.done [#allocation3], 64
    $region49: #{tpu_custom_call.1} parent=1 // pred_fallthru
      _
    // Predicated region
    $region50: #{tpu_custom_call.1} parent=1 // pred_check
      _
    $region51: #{tpu_custom_call.1} parent=1 // pred_check_branch
      %64 = sbr.rel (0) target = $region53
    $region52: #{tpu_custom_call.1} parent=1 // pred_region
      %65 = dma.done [#allocation6], 128
    $region53: #{tpu_custom_call.1} parent=1 // pred_fallthru
      _
    %v66 = vld [vmem:[%s0] sm:$0xff]
    %v67 = vld [vmem:[%s0 + $0x8] sm:$0xff]
    %v68 = vld [vmem:[%s3] sm:$0xff]
    %v69 = vld [vmem:[%s4] sm:$0xff]
    %71 = vset.pattern.permute.xlu0 0
    %72 = vperm.xlu0 %71, %v69
    %v73 = vpop.permute.xlu0 %72
    %vm75 = vcmask 130048
    %v77 = vsel %vm75, %v68, 0
    %79 = vmatprep.subr.mxu0 0.0
    %80 = vmatpush1.msra.mxu0 0.0
    %81 = vmatprep.subr.mxu0 0.0
    %82 = vmatpush1.msra.mxu0 0.0
    %83 = vmatprep.subr.mxu0 0.0
    %84 = vmatpush1.msra.mxu0 0.0
    %85 = vmatprep.subr.mxu0 0.0
    %86 = vmatpush1.msra.mxu0 0.0
    %87 = vmatprep.subr.mxu0 0.0
    %88 = vmatpush1.msra.mxu0 0.0
    %89 = vmatprep.subr.mxu0 0.0
    %90 = vmatpush1.msra.mxu0 0.0
    %91 = vmatprep.subr.mxu0 0.0
    %92 = vmatpush1.msra.mxu0 0.0
    %93 = vmatprep.subr.mxu0 0.0
    %94 = vmatpush1.msra.mxu0 0.0
    %95 = vmatprep.subr.mxu0 0.0
    %96 = vmatpush1.msra.mxu0 0.0
    %97 = vmatprep.subr.mxu0 0.0
    %98 = vmatpush1.msra.mxu0 0.0
    %99 = vmatprep.subr.mxu0 0.0
    %100 = vmatpush1.msra.mxu0 0.0
    %101 = vmatprep.subr.mxu0 0.0
    %102 = vmatpush1.msra.mxu0 0.0
    %103 = vmatprep.subr.mxu0 0.0
    %104 = vmatpush1.msra.mxu0 0.0
    %105 = vmatprep.subr.mxu0 0.0
    %106 = vmatpush1.msra.mxu0 0.0
    %107 = vmatprep.subr.mxu0 0.0
    %108 = vmatpush1.msra.mxu0 %v67
    %109 = vmatprep.subr.mxu0 0.0
    %110 = vmatpush1.msra.mxu0 %v66
    %111 = vmatprep.subr.mxu0 0.0
    %112 = vmatpush2.msra.mxu0 0.0
    %113 = vmatprep.subr.mxu0 0.0
    %114 = vmatpush2.msra.mxu0 0.0
    %115 = vmatprep.subr.mxu0 0.0
    %116 = vmatpush2.msra.mxu0 0.0
    %117 = vmatprep.subr.mxu0 0.0
    %118 = vmatpush2.msra.mxu0 0.0
    %119 = vmatprep.subr.mxu0 0.0
    %120 = vmatpush2.msra.mxu0 0.0
    %121 = vmatprep.subr.mxu0 0.0
    %122 = vmatpush2.msra.mxu0 0.0
    %123 = vmatprep.subr.mxu0 0.0
    %124 = vmatpush2.msra.mxu0 0.0
    %125 = vmatprep.subr.mxu0 0.0
    %126 = vmatpush2.msra.mxu0 0.0
    %127 = vmatprep.subr.mxu0 0.0
    %128 = vmatpush2.msra.mxu0 0.0
    %129 = vmatprep.subr.mxu0 0.0
    %130 = vmatpush2.msra.mxu0 0.0
    %131 = vmatprep.subr.mxu0 0.0
    %132 = vmatpush2.msra.mxu0 0.0
    %133 = vmatprep.subr.mxu0 0.0
    %134 = vmatpush2.msra.mxu0 0.0
    %135 = vmatprep.subr.mxu0 0.0
    %136 = vmatpush2.msra.mxu0 0.0
    %137 = vmatprep.subr.mxu0 0.0
    %138 = vmatpush2.msra.mxu0 0.0
    %139 = vmatprep.subr.mxu0 0.0
    %140 = vmatpush2.msra.mxu0 0.0
    %141 = vmatprep.subr.mxu0 0.0
    %142 = vmatpush2.msra.mxu0 0.0
    %143 = vmatprep.mubr.f32.mxu0 0.0
    %144 = vmatmul.mubr.f32.gmra.mxu0 %v77
    %v145 = vpop.f32.mrf.mxu0
    %v146 = vadd.f32 %v73, %v145
    %v147 = vpop.f32.mrf.mxu0
    %148 = vdwg.mxu0
    %v149 = vmul.f32 %v146, 0.5
    %v150 = vmul.f32 %v146, 0.70710677
    %v151 = verf.f32.pop %v150
    %v152 = vadd.f32 %v151, 1.0
    %v153 = vmul.f32 %v149, %v152
    %v154 = vld [vmem:[#allocation5] sm:$0xff]
    %v155 = vld [vmem:[%s6] sm:$0xff]
    %157 = vset.pattern.permute.xlu0 0
    %158 = vperm.xlu0 %157, %v155
    %v159 = vpop.permute.xlu0 %158
    %vm161 = vcmask 64512
    %v163 = vsel %vm161, %v154, 0
    %165 = vmatprep.subr.mxu0 0.0
    %166 = vmatpush1.msra.mxu0 0.0
    %167 = vmatprep.subr.mxu0 0.0
    %168 = vmatpush1.msra.mxu0 0.0
    %169 = vmatprep.subr.mxu0 0.0
    %170 = vmatpush1.msra.mxu0 0.0
    %171 = vmatprep.subr.mxu0 0.0
    %172 = vmatpush1.msra.mxu0 0.0
    %173 = vmatprep.subr.mxu0 0.0
    %174 = vmatpush1.msra.mxu0 0.0
    %175 = vmatprep.subr.mxu0 0.0
    %176 = vmatpush1.msra.mxu0 0.0
    %177 = vmatprep.subr.mxu0 0.0
    %178 = vmatpush1.msra.mxu0 0.0
    %179 = vmatprep.subr.mxu0 0.0
    %180 = vmatpush1.msra.mxu0 0.0
    %181 = vmatprep.subr.mxu0 0.0
    %182 = vmatpush1.msra.mxu0 0.0
    %183 = vmatprep.subr.mxu0 0.0
    %184 = vmatpush1.msra.mxu0 0.0
    %185 = vmatprep.subr.mxu0 0.0
    %186 = vmatpush1.msra.mxu0 0.0
    %187 = vmatprep.subr.mxu0 0.0
    %188 = vmatpush1.msra.mxu0 0.0
    %189 = vmatprep.subr.mxu0 0.0
    %190 = vmatpush1.msra.mxu0 0.0
    %191 = vmatprep.subr.mxu0 0.0
    %192 = vmatpush1.msra.mxu0 0.0
    %193 = vmatprep.subr.mxu0 0.0
    %194 = vmatpush1.msra.mxu0 0.0
    %195 = vmatprep.subr.mxu0 0.0
    %196 = vmatpush1.msra.mxu0 %v153
    %197 = vmatprep.subr.mxu0 0.0
    %198 = vmatpush2.msra.mxu0 0.0
    %199 = vmatprep.subr.mxu0 0.0
    %200 = vmatpush2.msra.mxu0 0.0
    %201 = vmatprep.subr.mxu0 0.0
    %202 = vmatpush2.msra.mxu0 0.0
    %203 = vmatprep.subr.mxu0 0.0
    %204 = vmatpush2.msra.mxu0 0.0
    %205 = vmatprep.subr.mxu0 0.0
    %206 = vmatpush2.msra.mxu0 0.0
    %207 = vmatprep.subr.mxu0 0.0
    %208 = vmatpush2.msra.mxu0 0.0
    %209 = vmatprep.subr.mxu0 0.0
    %210 = vmatpush2.msra.mxu0 0.0
    %211 = vmatprep.subr.mxu0 0.0
    %212 = vmatpush2.msra.mxu0 0.0
    %213 = vmatprep.subr.mxu0 0.0
    %214 = vmatpush2.msra.mxu0 0.0
    %215 = vmatprep.subr.mxu0 0.0
    %216 = vmatpush2.msra.mxu0 0.0
    %217 = vmatprep.subr.mxu0 0.0
    %218 = vmatpush2.msra.mxu0 0.0
    %219 = vmatprep.subr.mxu0 0.0
    %220 = vmatpush2.msra.mxu0 0.0
    %221 = vmatprep.subr.mxu0 0.0
    %222 = vmatpush2.msra.mxu0 0.0
    %223 = vmatprep.subr.mxu0 0.0
    %224 = vmatpush2.msra.mxu0 0.0
    %225 = vmatprep.subr.mxu0 0.0
    %226 = vmatpush2.msra.mxu0 0.0
    %227 = vmatprep.subr.mxu0 0.0
    %228 = vmatpush2.msra.mxu0 0.0
    %229 = vmatprep.mubr.f32.mxu0 0.0
    %230 = vmatmul.mubr.f32.gmra.mxu0 %v163
    %v231 = vpop.f32.mrf.mxu0
    %v232 = vadd.f32 %v159, %v231
    %v233 = vpop.f32.mrf.mxu0
    %234 = vdwg.mxu0
    %v235 = vld [vmem:[%s1] sm:$0xff]
    %v236 = vadd.f32 %v232, %v235
    %237 = vst [vmem:[#allocation7] sm:$0xff] %v236
    %v238 = vld [vmem:[%s7] sm:$0xf]
    %v239 = vld [vmem:[%s8] sm:$0xf]
    %241 = vset.pattern.permute.xlu0 0
    %242 = vperm.xlu0 %241, %v239
    %v243 = vpop.permute.xlu0 %242
    %v246 = vsel %vm161, %v238, 0
    %248 = vmatprep.subr.mxu0 0.0
    %249 = vmatpush1.msra.mxu0 0.0
    %250 = vmatprep.subr.mxu0 0.0
    %251 = vmatpush1.msra.mxu0 0.0
    %252 = vmatprep.subr.mxu0 0.0
    %253 = vmatpush1.msra.mxu0 0.0
    %254 = vmatprep.subr.mxu0 0.0
    %255 = vmatpush1.msra.mxu0 0.0
    %256 = vmatprep.subr.mxu0 0.0
    %257 = vmatpush1.msra.mxu0 0.0
    %258 = vmatprep.subr.mxu0 0.0
    %259 = vmatpush1.msra.mxu0 0.0
    %260 = vmatprep.subr.mxu0 0.0
    %261 = vmatpush1.msra.mxu0 0.0
    %262 = vmatprep.subr.mxu0 0.0
    %263 = vmatpush1.msra.mxu0 0.0
    %264 = vmatprep.subr.mxu0 0.0
    %265 = vmatpush1.msra.mxu0 0.0
    %266 = vmatprep.subr.mxu0 0.0
    %267 = vmatpush1.msra.mxu0 0.0
    %268 = vmatprep.subr.mxu0 0.0
    %269 = vmatpush1.msra.mxu0 0.0
    %270 = vmatprep.subr.mxu0 0.0
    %271 = vmatpush1.msra.mxu0 0.0
    %272 = vmatprep.subr.mxu0 0.0
    %273 = vmatpush1.msra.mxu0 0.0
    %274 = vmatprep.subr.mxu0 0.0
    %275 = vmatpush1.msra.mxu0 0.0
    %276 = vmatprep.subr.mxu0 0.0
    %277 = vmatpush1.msra.mxu0 0.0
    %278 = vmatprep.subr.mxu0 0.0
    %279 = vmatpush1.msra.mxu0 %v236
    %280 = vmatprep.subr.mxu0 0.0
    %281 = vmatpush2.msra.mxu0 0.0
    %282 = vmatprep.subr.mxu0 0.0
    %283 = vmatpush2.msra.mxu0 0.0
    %284 = vmatprep.subr.mxu0 0.0
    %285 = vmatpush2.msra.mxu0 0.0
    %286 = vmatprep.subr.mxu0 0.0
    %287 = vmatpush2.msra.mxu0 0.0
    %288 = vmatprep.subr.mxu0 0.0
    %289 = vmatpush2.msra.mxu0 0.0
    %290 = vmatprep.subr.mxu0 0.0
    %291 = vmatpush2.msra.mxu0 0.0
    %292 = vmatprep.subr.mxu0 0.0
    %293 = vmatpush2.msra.mxu0 0.0
    %294 = vmatprep.subr.mxu0 0.0
    %295 = vmatpush2.msra.mxu0 0.0
    %296 = vmatprep.subr.mxu0 0.0
    %297 = vmatpush2.msra.mxu0 0.0
    %298 = vmatprep.subr.mxu0 0.0
    %299 = vmatpush2.msra.mxu0 0.0
    %300 = vmatprep.subr.mxu0 0.0
    %301 = vmatpush2.msra.mxu0 0.0
    %302 = vmatprep.subr.mxu0 0.0
    %303 = vmatpush2.msra.mxu0 0.0
    %304 = vmatprep.subr.mxu0 0.0
    %305 = vmatpush2.msra.mxu0 0.0
    %306 = vmatprep.subr.mxu0 0.0
    %307 = vmatpush2.msra.mxu0 0.0
    %308 = vmatprep.subr.mxu0 0.0
    %309 = vmatpush2.msra.mxu0 0.0
    %310 = vmatprep.subr.mxu0 0.0
    %311 = vmatpush2.msra.mxu0 0.0
    %312 = vmatprep.mubr.f32.mxu0 0.0
    %313 = vmatmul.mubr.f32.gmra.mxu0 %v246
    %v314 = vpop.f32.mrf.mxu0
    %v315 = vadd.f32 %v243, %v314
    %v316 = vpop.f32.mrf.mxu0
    %317 = vdwg.mxu0
    %v318 = vmul.f32 %v315, 0.5
    %v319 = vmul.f32 %v315, 0.70710677
    %v320 = verf.f32.pop %v319
    %v321 = vadd.f32 %v320, 1.0
    %v322 = vmul.f32 %v318, %v321
    %v323 = vld [vmem:[%s9] sm:$0xf]
    %v324 = vld [vmem:[%s10] sm:$0xf]
    %326 = vset.pattern.permute.xlu0 0
    %327 = vperm.xlu0 %326, %v324
    %v328 = vpop.permute.xlu0 %327
    %vm330 = vcmask 31744
    %v332 = vsel %vm330, %v323, 0
    %vm334 = vcmask 1043456
    %v336 = vsel %vm334, %v322, 0
    %338 = vmatprep.subr.mxu0 0.0
    %339 = vmatpush1.msra.mxu0 0.0
    %340 = vmatprep.subr.mxu0 0.0
    %341 = vmatpush1.msra.mxu0 0.0
    %342 = vmatprep.subr.mxu0 0.0
    %343 = vmatpush1.msra.mxu0 0.0
    %344 = vmatprep.subr.mxu0 0.0
    %345 = vmatpush1.msra.mxu0 0.0
    %346 = vmatprep.subr.mxu0 0.0
    %347 = vmatpush1.msra.mxu0 0.0
    %348 = vmatprep.subr.mxu0 0.0
    %349 = vmatpush1.msra.mxu0 0.0
    %350 = vmatprep.subr.mxu0 0.0
    %351 = vmatpush1.msra.mxu0 0.0
    %352 = vmatprep.subr.mxu0 0.0
    %353 = vmatpush1.msra.mxu0 0.0
    %354 = vmatprep.subr.mxu0 0.0
    %355 = vmatpush1.msra.mxu0 0.0
    %356 = vmatprep.subr.mxu0 0.0
    %357 = vmatpush1.msra.mxu0 0.0
    %358 = vmatprep.subr.mxu0 0.0
    %359 = vmatpush1.msra.mxu0 0.0
    %360 = vmatprep.subr.mxu0 0.0
    %361 = vmatpush1.msra.mxu0 0.0
    %362 = vmatprep.subr.mxu0 0.0
    %363 = vmatpush1.msra.mxu0 0.0
    %364 = vmatprep.subr.mxu0 0.0
    %365 = vmatpush1.msra.mxu0 0.0
    %366 = vmatprep.subr.mxu0 0.0
    %367 = vmatpush1.msra.mxu0 0.0
    %368 = vmatprep.subr.mxu0 0.0
    %369 = vmatpush1.msra.mxu0 %v336
    %370 = vmatprep.subr.mxu0 0.0
    %371 = vmatpush2.msra.mxu0 0.0
    %372 = vmatprep.subr.mxu0 0.0
    %373 = vmatpush2.msra.mxu0 0.0
    %374 = vmatprep.subr.mxu0 0.0
    %375 = vmatpush2.msra.mxu0 0.0
    %376 = vmatprep.subr.mxu0 0.0
    %377 = vmatpush2.msra.mxu0 0.0
    %378 = vmatprep.subr.mxu0 0.0
    %379 = vmatpush2.msra.mxu0 0.0
    %380 = vmatprep.subr.mxu0 0.0
    %381 = vmatpush2.msra.mxu0 0.0
    %382 = vmatprep.subr.mxu0 0.0
    %383 = vmatpush2.msra.mxu0 0.0
    %384 = vmatprep.subr.mxu0 0.0
    %385 = vmatpush2.msra.mxu0 0.0
    %386 = vmatprep.subr.mxu0 0.0
    %387 = vmatpush2.msra.mxu0 0.0
    %388 = vmatprep.subr.mxu0 0.0
    %389 = vmatpush2.msra.mxu0 0.0
    %390 = vmatprep.subr.mxu0 0.0
    %391 = vmatpush2.msra.mxu0 0.0
    %392 = vmatprep.subr.mxu0 0.0
    %393 = vmatpush2.msra.mxu0 0.0
    %394 = vmatprep.subr.mxu0 0.0
    %395 = vmatpush2.msra.mxu0 0.0
    %396 = vmatprep.subr.mxu0 0.0
    %397 = vmatpush2.msra.mxu0 0.0
    %398 = vmatprep.subr.mxu0 0.0
    %399 = vmatpush2.msra.mxu0 0.0
    %400 = vmatprep.subr.mxu0 0.0
    %401 = vmatpush2.msra.mxu0 0.0
    %402 = vmatprep.mubr.f32.mxu0 0.0
    %403 = vmatmul.mubr.f32.gmra.mxu0 %v332
    %v404 = vpop.f32.mrf.mxu0
    %v405 = vadd.f32 %v328, %v404
    %v406 = vpop.f32.mrf.mxu0
    %407 = vdwg.mxu0
    %v408 = vld [vmem:[#allocation2] sm:$0xf]
    %v409 = vadd.f32 %v405, %v408
    %410 = vst [vmem:[#allocation8] sm:$0xf] %v409
    // Predicated region
    $region54: #{tpu_custom_call.1} parent=1 // pred_check
      _
    $region55: #{tpu_custom_call.1} parent=1 // pred_check_branch
      %412 = sbr.rel (0) target = $region57
    $region56: #{tpu_custom_call.1} parent=1 // pred_region
      %s414 = ssub.s32 128, 128
      %415 = vsyncadd [#allocation4], %s414
      %s417 = sshll.u32 [#allocation7], 4
      %s418 = int_to_ptr.vmem [resolvable:$true] %s417
      %420 = dma.vmem_to_hbm [thread:$0]  %s418, 128, %s11, [#allocation4]
    $region57: #{tpu_custom_call.1} parent=1 // pred_fallthru
      _
    // Predicated region
    $region58: #{tpu_custom_call.1} parent=1 // pred_check
      _
    $region59: #{tpu_custom_call.1} parent=1 // pred_check_branch
      %422 = sbr.rel (0) target = $region61
    $region60: #{tpu_custom_call.1} parent=1 // pred_region
      %s424 = ssub.s32 64, 64
      %425 = vsyncadd [#allocation9], %s424
      %s427 = sshll.u32 [#allocation8], 4
      %s428 = int_to_ptr.vmem [resolvable:$true] %s427
      %430 = dma.vmem_to_hbm [thread:$0]  %s428, 64, %s12, [#allocation9]
    $region61: #{tpu_custom_call.1} parent=1 // pred_fallthru
      _
    // Predicated region
    $region62: #{tpu_custom_call.1} parent=1 // pred_check
      _
    $region63: #{tpu_custom_call.1} parent=1 // pred_check_branch
      %432 = sbr.rel (0) target = $region65
    $region64: #{tpu_custom_call.1} parent=1 // pred_region
      %433 = dma.done [#allocation4], 128
    $region65: #{tpu_custom_call.1} parent=1 // pred_fallthru
      _
    // Predicated region
    $region66: #{tpu_custom_call.1} parent=1 // pred_check
      _
    $region67: #{tpu_custom_call.1} parent=1 // pred_check_branch
      %435 = sbr.rel (0) target = $region69
    $region68: #{tpu_custom_call.1} parent=1 // pred_region
      %436 = dma.done [#allocation9], 64
    $region69: #{tpu_custom_call.1} parent=1 // pred_fallthru
      _
    %437 = vsyncpa [#allocation3], 1
    %438 = vsyncpa [#allocation6], 1
    %439 = vsyncpa [#allocation4], 1
    %440 = vsyncpa [#allocation9], 1

</llo_original>
